<compile_context>
chip_gen: v7x
topology: tpu7x:2x2x1
jax: 0.10.0
libtpu: 0.0.40
codegen_flags: <defaults>
</compile_context>

<pallas_src>
import functools
import math

import jax
import jax.numpy as jnp
from jax.experimental import pallas as pl
from jax.experimental.pallas import tpu as pltpu

_EPS = 1e-5
_LANE = 128


def _encoder_kernel(x_ref, w_ref, gamma_ref, beta_ref, alpha_ref, o_ref,
                    *, n_layers, compute_dtype):
    # x: [B, Dpad] f32 (VMEM)          w: [L, Dpad, Dpad] compute_dtype (VMEM)
    # gamma/beta: [L, Dpad] f32 (VMEM) alpha: [L] f32 (SMEM)
    h = x_ref[...]  # f32
    for l in range(n_layers):  # small, static -> unrolled
        w = w_ref[l]  # [Dpad, Dpad], already transposed at pack time
        # Linear (bias omitted: cancelled exactly by BN mean subtraction).
        y = jnp.dot(h.astype(compute_dtype), w,
                    preferred_element_type=jnp.float32)
        # BatchNorm1d, training-mode batch statistics (biased variance).
        mu = jnp.mean(y, axis=0, keepdims=True)
        var = jnp.maximum(jnp.mean(y * y, axis=0, keepdims=True) - mu * mu, 0.0)
        scale = gamma_ref[l:l + 1, :] * jax.lax.rsqrt(var + _EPS)   # [1, Dpad]
        shift = beta_ref[l:l + 1, :] - mu * scale                   # [1, Dpad]
        z = y * scale + shift                                       # one FMA/elt
        # PReLU with a single learnable slope (scalar from SMEM).
        alpha = alpha_ref[l]
        h = jnp.where(z > 0, z, alpha * z)
    o_ref[...] = h  # lane-dense [B, Dpad] f32 store


def init_encoder_params(key, n_input, n_latent, layer_sizes):
    """Matches the PyTorch module's parameter shapes / init.

    Per block: Linear(Din, Dout) with xavier_uniform_ weight and default bias
    init, BatchNorm1d(Dout) with gamma=1 / beta=0, PReLU with alpha=0.25.
    """
    sizes = [n_input] + list(layer_sizes) + [n_latent]
    params = []
    for idx in range(len(sizes) - 1):
        din, dout = sizes[idx], sizes[idx + 1]
        key, kw, kb = jax.random.split(key, 3)
        limit_w = math.sqrt(6.0 / (din + dout))          # xavier_uniform_
        w = jax.random.uniform(kw, (dout, din), jnp.float32, -limit_w, limit_w)
        limit_b = 1.0 / math.sqrt(din)                   # nn.Linear default bias
        b = jax.random.uniform(kb, (dout,), jnp.float32, -limit_b, limit_b)
        gamma = jnp.ones((dout,), jnp.float32)
        beta = jnp.zeros((dout,), jnp.float32)
        alpha = jnp.float32(0.25)
        params.append((w, b, gamma, beta, alpha))
    return params


def pack_encoder_params(params, compute_dtype=jnp.float32):
    """Pre-transpose, zero-pad to a lane-dense width, and stack all layers."""
    max_dim = max(max(w.shape) for (w, _, _, _, _) in params)
    d_pad = _LANE * pl.cdiv(max_dim, _LANE)
    n_layers = len(params)
    W = jnp.zeros((n_layers, d_pad, d_pad), compute_dtype)
    G = jnp.ones((n_layers, d_pad), jnp.float32)   # gamma=1 in pad cols (inert)
    Bt = jnp.zeros((n_layers, d_pad), jnp.float32)  # beta=0 in pad cols
    A = jnp.zeros((n_layers,), jnp.float32)
    for l, (w, _b, g, bt, a) in enumerate(params):
        dout, din = w.shape
        W = W.at[l, :din, :dout].set(w.T.astype(compute_dtype))
        G = G.at[l, :dout].set(g)
        Bt = Bt.at[l, :dout].set(bt)
        A = A.at[l].set(a)
    return W, G, Bt, A, d_pad


def encoder_forward_fused(x, W, G, Bt, A, *, n_latent, compute_dtype):
    B, n_input = x.shape
    n_layers, d_pad, _ = W.shape
    x_pad = jnp.pad(x, ((0, 0), (0, d_pad - n_input)))  # lane-dense input
    vmem = pltpu.MemorySpace.VMEM
    smem = pltpu.MemorySpace.SMEM
    out = pl.pallas_call(
        functools.partial(_encoder_kernel, n_layers=n_layers,
                          compute_dtype=compute_dtype),
        out_shape=jax.ShapeDtypeStruct((B, d_pad), jnp.float32),
        in_specs=[
            pl.BlockSpec(memory_space=vmem),   # x
            pl.BlockSpec(memory_space=vmem),   # W (stacked, pre-transposed)
            pl.BlockSpec(memory_space=vmem),   # gamma
            pl.BlockSpec(memory_space=vmem),   # beta
            pl.BlockSpec(memory_space=smem),   # alpha (scalars)
        ],
        out_specs=pl.BlockSpec(memory_space=vmem),
        compiler_params=pltpu.CompilerParams(vmem_limit_bytes=32 * 1024 * 1024),
    )(x_pad, W, G, Bt, A)
    return out[:, :n_latent]


def encoder_forward(x, params, *, n_latent, compute_dtype=jnp.float32):
    W, G, Bt, A, _ = pack_encoder_params(params, compute_dtype=compute_dtype)
    return encoder_forward_fused(x, W, G, Bt, A, n_latent=n_latent,
                                 compute_dtype=compute_dtype)


def encoder_reference(x, params, compute_dtype=jnp.float32):
    """Pure-JAX reference (keeps the Linear bias + two-pass variance)."""
    for (w, b, gamma, beta, alpha) in params:
        y = jnp.dot(x.astype(compute_dtype), w.T.astype(compute_dtype),
                    preferred_element_type=jnp.float32) + b
        mu = jnp.mean(y, axis=0, keepdims=True)
        var = jnp.mean((y - mu) ** 2, axis=0, keepdims=True)
        z = gamma * (y - mu) / jnp.sqrt(var + _EPS) + beta
        x = jnp.where(z > 0, z, alpha * z)
    return x


if __name__ == "__main__":
    key = jax.random.PRNGKey(0)
    n_input, n_latent = 32, 8
    layer_sizes = [16, 16]
    batch = 8

    kparams, kx = jax.random.split(key)
    params = init_encoder_params(kparams, n_input, n_latent, layer_sizes)
    x = jax.random.normal(kx, (batch, n_input), jnp.float32)

    # f32 path: matches the PyTorch train-mode forward tightly.
    out = jax.block_until_ready(
        encoder_forward(x, params, n_latent=n_latent, compute_dtype=jnp.float32))
    ref = encoder_reference(x, params, compute_dtype=jnp.float32)
    assert out.shape == (batch, n_latent), out.shape
    assert jnp.allclose(out, ref, atol=1e-4, rtol=1e-4), (
        float(jnp.max(jnp.abs(out - ref))))

    # bf16 MXU-input path (recommended on v6e/v7x); compared against a
    # bf16-weight reference with a looser tolerance.
    out_bf = jax.block_until_ready(
        encoder_forward(x, params, n_latent=n_latent, compute_dtype=jnp.bfloat16))
    ref_bf = encoder_reference(x, params, compute_dtype=jnp.bfloat16)
    assert jnp.allclose(out_bf, ref_bf, atol=2e-2, rtol=2e-2), (
        float(jnp.max(jnp.abs(out_bf - ref_bf))))

    print("KERNEL_OK")
</pallas_src>

<mosaic_0001>
module attributes {stable_mosaic.version = 11 : i64} {
  func.func @_encoder_kernel(%arg0: memref<8x128xf32, #tpu.memory_space<vmem>>, %arg1: memref<3x128x128xf32, #tpu.memory_space<vmem>>, %arg2: memref<3x128xf32, #tpu.memory_space<vmem>>, %arg3: memref<3x128xf32, #tpu.memory_space<vmem>>, %arg4: memref<3xf32, #tpu.memory_space<smem>>, %arg5: memref<8x128xf32, #tpu.memory_space<vmem>>) attributes {dimension_semantics = [], scalar_prefetch = 0 : i64, scratch_operands = 0 : i64, tpu.core_type = #tpu.core_type<tc>} {
    %c0 = arith.constant 0 : index
    %c0_0 = arith.constant 0 : index
    %0 = vector.load %arg0[%c0, %c0_0] : memref<8x128xf32, #tpu.memory_space<vmem>>, vector<8x128xf32>
    %c0_1 = arith.constant 0 : index
    %c0_2 = arith.constant 0 : index
    %c0_3 = arith.constant 0 : index
    %1 = vector.load %arg1[%c0_1, %c0_2, %c0_3] : memref<3x128x128xf32, #tpu.memory_space<vmem>>, vector<1x128x128xf32>
    %2 = vector.shape_cast %1 : vector<1x128x128xf32> to vector<128x128xf32>
    %cst = arith.constant dense<0.000000e+00> : vector<8x128xf32>
    %3 = tpu.matmul %0, %2, %cst {dimension_numbers = #tpu.dot_dimension_numbers<[1], [0], [0], [1], [0, 0, 1, 1], [], []>} : vector<8x128xf32>, vector<128x128xf32>, vector<8x128xf32> -> vector<8x128xf32>
    %cst_4 = arith.constant dense<0.000000e+00> : vector<128xf32>
    %4 = vector.multi_reduction <add>, %3, %cst_4 [0] : vector<8x128xf32> to vector<128xf32>
    %5 = vector.shape_cast %4 : vector<128xf32> to vector<1x128xf32>
    %cst_5 = arith.constant 8.000000e+00 : f32
    %6 = vector.broadcast %cst_5 : f32 to vector<1x128xf32>
    %7 = arith.divf %5, %6 : vector<1x128xf32>
    %8 = arith.mulf %3, %3 : vector<8x128xf32>
    %cst_6 = arith.constant dense<0.000000e+00> : vector<128xf32>
    %9 = vector.multi_reduction <add>, %8, %cst_6 [0] : vector<8x128xf32> to vector<128xf32>
    %10 = vector.shape_cast %9 : vector<128xf32> to vector<1x128xf32>
    %cst_7 = arith.constant 8.000000e+00 : f32
    %11 = vector.broadcast %cst_7 : f32 to vector<1x128xf32>
    %12 = arith.divf %10, %11 : vector<1x128xf32>
    %13 = arith.mulf %7, %7 : vector<1x128xf32>
    %14 = arith.subf %12, %13 : vector<1x128xf32>
    %cst_8 = arith.constant 0.000000e+00 : f32
    %15 = vector.broadcast %cst_8 : f32 to vector<1x128xf32>
    %16 = arith.maximumf %14, %15 : vector<1x128xf32>
    %c0_9 = arith.constant 0 : index
    %c0_10 = arith.constant 0 : index
    %17 = vector.load %arg2[%c0_9, %c0_10] : memref<3x128xf32, #tpu.memory_space<vmem>>, vector<1x128xf32>
    %cst_11 = arith.constant 9.99999974E-6 : f32
    %18 = vector.broadcast %cst_11 : f32 to vector<1x128xf32>
    %19 = arith.addf %16, %18 : vector<1x128xf32>
    %20 = math.rsqrt %19 : vector<1x128xf32>
    %21 = arith.mulf %17, %20 : vector<1x128xf32>
    %c0_12 = arith.constant 0 : index
    %c0_13 = arith.constant 0 : index
    %22 = vector.load %arg3[%c0_12, %c0_13] : memref<3x128xf32, #tpu.memory_space<vmem>>, vector<1x128xf32>
    %23 = arith.mulf %7, %21 : vector<1x128xf32>
    %24 = arith.subf %22, %23 : vector<1x128xf32>
    %25 = vector.broadcast %21 : vector<1x128xf32> to vector<8x128xf32>
    %26 = arith.mulf %3, %25 : vector<8x128xf32>
    %27 = vector.broadcast %24 : vector<1x128xf32> to vector<8x128xf32>
    %28 = arith.addf %26, %27 : vector<8x128xf32>
    %c0_14 = arith.constant 0 : index
    %29 = memref.load %arg4[%c0_14] : memref<3xf32, #tpu.memory_space<smem>>
    %cst_15 = arith.constant 0.000000e+00 : f32
    %30 = vector.broadcast %cst_15 : f32 to vector<8x128xf32>
    %31 = arith.cmpf ogt, %28, %30 : vector<8x128xf32>
    %32 = vector.broadcast %29 : f32 to vector<8x128xf32>
    %33 = arith.mulf %32, %28 : vector<8x128xf32>
    %34 = arith.select %31, %28, %33 : vector<8x128xi1>, vector<8x128xf32>
    %c1 = arith.constant 1 : index
    %c0_16 = arith.constant 0 : index
    %c0_17 = arith.constant 0 : index
    %35 = vector.load %arg1[%c1, %c0_16, %c0_17] : memref<3x128x128xf32, #tpu.memory_space<vmem>>, vector<1x128x128xf32>
    %36 = vector.shape_cast %35 : vector<1x128x128xf32> to vector<128x128xf32>
    %cst_18 = arith.constant dense<0.000000e+00> : vector<8x128xf32>
    %37 = tpu.matmul %34, %36, %cst_18 {dimension_numbers = #tpu.dot_dimension_numbers<[1], [0], [0], [1], [0, 0, 1, 1], [], []>} : vector<8x128xf32>, vector<128x128xf32>, vector<8x128xf32> -> vector<8x128xf32>
    %cst_19 = arith.constant dense<0.000000e+00> : vector<128xf32>
    %38 = vector.multi_reduction <add>, %37, %cst_19 [0] : vector<8x128xf32> to vector<128xf32>
    %39 = vector.shape_cast %38 : vector<128xf32> to vector<1x128xf32>
    %cst_20 = arith.constant 8.000000e+00 : f32
    %40 = vector.broadcast %cst_20 : f32 to vector<1x128xf32>
    %41 = arith.divf %39, %40 : vector<1x128xf32>
    %42 = arith.mulf %37, %37 : vector<8x128xf32>
    %cst_21 = arith.constant dense<0.000000e+00> : vector<128xf32>
    %43 = vector.multi_reduction <add>, %42, %cst_21 [0] : vector<8x128xf32> to vector<128xf32>
    %44 = vector.shape_cast %43 : vector<128xf32> to vector<1x128xf32>
    %cst_22 = arith.constant 8.000000e+00 : f32
    %45 = vector.broadcast %cst_22 : f32 to vector<1x128xf32>
    %46 = arith.divf %44, %45 : vector<1x128xf32>
    %47 = arith.mulf %41, %41 : vector<1x128xf32>
    %48 = arith.subf %46, %47 : vector<1x128xf32>
    %cst_23 = arith.constant 0.000000e+00 : f32
    %49 = vector.broadcast %cst_23 : f32 to vector<1x128xf32>
    %50 = arith.maximumf %48, %49 : vector<1x128xf32>
    %c1_24 = arith.constant 1 : index
    %c0_25 = arith.constant 0 : index
    %51 = vector.load %arg2[%c1_24, %c0_25] : memref<3x128xf32, #tpu.memory_space<vmem>>, vector<1x128xf32>
    %cst_26 = arith.constant 9.99999974E-6 : f32
    %52 = vector.broadcast %cst_26 : f32 to vector<1x128xf32>
    %53 = arith.addf %50, %52 : vector<1x128xf32>
    %54 = math.rsqrt %53 : vector<1x128xf32>
    %55 = arith.mulf %51, %54 : vector<1x128xf32>
    %c1_27 = arith.constant 1 : index
    %c0_28 = arith.constant 0 : index
    %56 = vector.load %arg3[%c1_27, %c0_28] : memref<3x128xf32, #tpu.memory_space<vmem>>, vector<1x128xf32>
    %57 = arith.mulf %41, %55 : vector<1x128xf32>
    %58 = arith.subf %56, %57 : vector<1x128xf32>
    %59 = vector.broadcast %55 : vector<1x128xf32> to vector<8x128xf32>
    %60 = arith.mulf %37, %59 : vector<8x128xf32>
    %61 = vector.broadcast %58 : vector<1x128xf32> to vector<8x128xf32>
    %62 = arith.addf %60, %61 : vector<8x128xf32>
    %c1_29 = arith.constant 1 : index
    %63 = memref.load %arg4[%c1_29] : memref<3xf32, #tpu.memory_space<smem>>
    %cst_30 = arith.constant 0.000000e+00 : f32
    %64 = vector.broadcast %cst_30 : f32 to vector<8x128xf32>
    %65 = arith.cmpf ogt, %62, %64 : vector<8x128xf32>
    %66 = vector.broadcast %63 : f32 to vector<8x128xf32>
    %67 = arith.mulf %66, %62 : vector<8x128xf32>
    %68 = arith.select %65, %62, %67 : vector<8x128xi1>, vector<8x128xf32>
    %c2 = arith.constant 2 : index
    %c0_31 = arith.constant 0 : index
    %c0_32 = arith.constant 0 : index
    %69 = vector.load %arg1[%c2, %c0_31, %c0_32] : memref<3x128x128xf32, #tpu.memory_space<vmem>>, vector<1x128x128xf32>
    %70 = vector.shape_cast %69 : vector<1x128x128xf32> to vector<128x128xf32>
    %cst_33 = arith.constant dense<0.000000e+00> : vector<8x128xf32>
    %71 = tpu.matmul %68, %70, %cst_33 {dimension_numbers = #tpu.dot_dimension_numbers<[1], [0], [0], [1], [0, 0, 1, 1], [], []>} : vector<8x128xf32>, vector<128x128xf32>, vector<8x128xf32> -> vector<8x128xf32>
    %cst_34 = arith.constant dense<0.000000e+00> : vector<128xf32>
    %72 = vector.multi_reduction <add>, %71, %cst_34 [0] : vector<8x128xf32> to vector<128xf32>
    %73 = vector.shape_cast %72 : vector<128xf32> to vector<1x128xf32>
    %cst_35 = arith.constant 8.000000e+00 : f32
    %74 = vector.broadcast %cst_35 : f32 to vector<1x128xf32>
    %75 = arith.divf %73, %74 : vector<1x128xf32>
    %76 = arith.mulf %71, %71 : vector<8x128xf32>
    %cst_36 = arith.constant dense<0.000000e+00> : vector<128xf32>
    %77 = vector.multi_reduction <add>, %76, %cst_36 [0] : vector<8x128xf32> to vector<128xf32>
    %78 = vector.shape_cast %77 : vector<128xf32> to vector<1x128xf32>
    %cst_37 = arith.constant 8.000000e+00 : f32
    %79 = vector.broadcast %cst_37 : f32 to vector<1x128xf32>
    %80 = arith.divf %78, %79 : vector<1x128xf32>
    %81 = arith.mulf %75, %75 : vector<1x128xf32>
    %82 = arith.subf %80, %81 : vector<1x128xf32>
    %cst_38 = arith.constant 0.000000e+00 : f32
    %83 = vector.broadcast %cst_38 : f32 to vector<1x128xf32>
    %84 = arith.maximumf %82, %83 : vector<1x128xf32>
    %c2_39 = arith.constant 2 : index
    %c0_40 = arith.constant 0 : index
    %85 = vector.load %arg2[%c2_39, %c0_40] : memref<3x128xf32, #tpu.memory_space<vmem>>, vector<1x128xf32>
    %cst_41 = arith.constant 9.99999974E-6 : f32
    %86 = vector.broadcast %cst_41 : f32 to vector<1x128xf32>
    %87 = arith.addf %84, %86 : vector<1x128xf32>
    %88 = math.rsqrt %87 : vector<1x128xf32>
    %89 = arith.mulf %85, %88 : vector<1x128xf32>
    %c2_42 = arith.constant 2 : index
    %c0_43 = arith.constant 0 : index
    %90 = vector.load %arg3[%c2_42, %c0_43] : memref<3x128xf32, #tpu.memory_space<vmem>>, vector<1x128xf32>
    %91 = arith.mulf %75, %89 : vector<1x128xf32>
    %92 = arith.subf %90, %91 : vector<1x128xf32>
    %93 = vector.broadcast %89 : vector<1x128xf32> to vector<8x128xf32>
    %94 = arith.mulf %71, %93 : vector<8x128xf32>
    %95 = vector.broadcast %92 : vector<1x128xf32> to vector<8x128xf32>
    %96 = arith.addf %94, %95 : vector<8x128xf32>
    %c2_44 = arith.constant 2 : index
    %97 = memref.load %arg4[%c2_44] : memref<3xf32, #tpu.memory_space<smem>>
    %cst_45 = arith.constant 0.000000e+00 : f32
    %98 = vector.broadcast %cst_45 : f32 to vector<8x128xf32>
    %99 = arith.cmpf ogt, %96, %98 : vector<8x128xf32>
    %100 = vector.broadcast %97 : f32 to vector<8x128xf32>
    %101 = arith.mulf %100, %96 : vector<8x128xf32>
    %102 = arith.select %99, %96, %101 : vector<8x128xi1>, vector<8x128xf32>
    %c0_46 = arith.constant 0 : index
    %c0_47 = arith.constant 0 : index
    %103 = vector.load %arg5[%c0_46, %c0_47] : memref<8x128xf32, #tpu.memory_space<vmem>>, vector<8x128xf32>
    tpu.vector_store %arg5[%c0_46, %c0_47], %102 {strides = array<i32>} : memref<8x128xf32, #tpu.memory_space<vmem>>, vector<8x128xf32>,
    return
  }
}

</mosaic_0001>

<llo_original>
// kernel: tpu_custom_call.1
$region0: #{tpu_custom_call.1}
  #allocation0 [shape = 'u32[]', space=smem, size = 0x4, offset = 0x4, fixed_abs, tag = 'smem constant byte address 0x4 - core index']
  #allocation1 [shape = 'u32[144,128]{1,0:T(1,128)}', space=vmem, size = 0x12000, scoped, tag = 'internal scratch']
  %s0 = inlined_call_operand.hbm [shape: f32[8,128], index: 0, kind: input, shape index: {}]
  %s1 = inlined_call_operand.hbm [shape: f32[3,128,128], index: 1, kind: input, shape index: {}]
  %s2 = inlined_call_operand.vmem [shape: f32[3,128], index: 2, kind: input, shape index: {}]
  %s3 = inlined_call_operand.vmem [shape: f32[3,128], index: 3, kind: input, shape index: {}]
  %s4 = inlined_call_operand.vmem [shape: f32[3], index: 4, kind: input, shape index: {}]
  %s5 = inlined_call_operand.hbm [shape: f32[8,128], index: 5, kind: output, shape index: {}]
  %s6 = sld [smem:[#allocation0]]
  $region42: #{tpu_custom_call.1} parent=0
    _
  %s8 = ssub.s32 1, %s6
  %s9 = scalar_select 0, %s8, %s6
  $region1: #{tpu_custom_call.1} parent=0
    #allocation2 [shape = 'u8[4096]{0}', space=vmem, size = 0x1000, scoped, tag = 'input window, operand 0, single buffered']
    #allocation3 [shape = 's32[1]{0}', space=sflag, size = 0x4, scoped, tag = 'scoped memory for tpu_custom_call.1']
    #allocation4 [shape = 's32[1]{0}', space=sflag, size = 0x4, scoped, tag = 'scoped memory for tpu_custom_call.1']
    #allocation5 [shape = 's32[1]{0}', space=sflag, size = 0x4, scoped, tag = 'scoped memory for tpu_custom_call.1']
    #allocation6 [shape = 'u8[196608]{0}', space=vmem, size = 0x30000, scoped, tag = 'input window, operand 1, single buffered']
    #allocation7 [shape = 's32[1]{0}', space=sflag, size = 0x4, scoped, tag = 'scoped memory for tpu_custom_call.1']
    #allocation8 [shape = 'u8[512]{0}', space=smem, size = 0x200, scoped, tag = 'input window, operand 4, single buffered']
    #allocation9 [shape = 'u8[4096]{0}', space=vmem, size = 0x1000, scoped, tag = 'output window, operand 0, single buffered']
    %10 = vsyncpa [#allocation3], 0
    %11 = vsyncpa [#allocation7], 0
    %12 = vsyncpa [#allocation5], 0
    %13 = vsyncpa [#allocation4], 0
    // Predicated region
    $region2: #{tpu_custom_call.1} parent=1 // pred_check
      _
    $region3: #{tpu_custom_call.1} parent=1 // pred_check_branch
      %15 = sbr.rel (0) target = $region5
    $region4: #{tpu_custom_call.1} parent=1 // pred_region
      %s17 = ssub.s32 128, 128
      %18 = vsyncadd [#allocation3], %s17
      %s20 = sshll.u32 [#allocation2], 4
      %s21 = int_to_ptr.vmem [resolvable:$true] %s20
      %23 = dma.hbm_to_vmem [thread:$0]  %s0, 128, %s21, [#allocation3]
    $region5: #{tpu_custom_call.1} parent=1 // pred_fallthru
      _
    // Predicated region
    $region6: #{tpu_custom_call.1} parent=1 // pred_check
      _
    $region7: #{tpu_custom_call.1} parent=1 // pred_check_branch
      %25 = sbr.rel (0) target = $region9
    $region8: #{tpu_custom_call.1} parent=1 // pred_region
      %s27 = ssub.s32 6144, 6144
      %28 = vsyncadd [#allocation7], %s27
      %s29 = sshll.u32 [#allocation6], 4
      %s30 = int_to_ptr.vmem [resolvable:$true] %s29
      %35 = dma.hbm_to_vmem [thread:$0]  %s1, 6144, %s30, [#allocation7], 128, 128, 8
    $region9: #{tpu_custom_call.1} parent=1 // pred_fallthru
      _
    // Predicated region
    $region10: #{tpu_custom_call.1} parent=1 // pred_check
      _
    $region11: #{tpu_custom_call.1} parent=1 // pred_check_branch
      %37 = sbr.rel (0) target = $region13
    $region12: #{tpu_custom_call.1} parent=1 // pred_region
      _
    $region13: #{tpu_custom_call.1} parent=1 // pred_fallthru
      _
    // Predicated region
    $region14: #{tpu_custom_call.1} parent=1 // pred_check
      _
    $region15: #{tpu_custom_call.1} parent=1 // pred_check_branch
      %39 = sbr.rel (0) target = $region17
    $region16: #{tpu_custom_call.1} parent=1 // pred_region
      _
    $region17: #{tpu_custom_call.1} parent=1 // pred_fallthru
      _
    // Predicated region
    $region18: #{tpu_custom_call.1} parent=1 // pred_check
      _
    $region19: #{tpu_custom_call.1} parent=1 // pred_check_branch
      %41 = sbr.rel (0) target = $region21
    $region20: #{tpu_custom_call.1} parent=1 // pred_region
      %s43 = ssub.s32 16, 16
      %44 = vsyncadd [#allocation5], %s43
      %s46 = sshll.u32 %s4, 4
      %s47 = int_to_ptr.vmem [resolvable:$true] %s46
      %49 = dma.vmem_to_smem %s47, 16, [#allocation8], [#allocation5]
    $region21: #{tpu_custom_call.1} parent=1 // pred_fallthru
      _
    // Predicated region
    $region22: #{tpu_custom_call.1} parent=1 // pred_check
      _
    $region23: #{tpu_custom_call.1} parent=1 // pred_check_branch
      %51 = sbr.rel (0) target = $region25
    $region24: #{tpu_custom_call.1} parent=1 // pred_region
      %52 = dma.done [#allocation3], 128
    $region25: #{tpu_custom_call.1} parent=1 // pred_fallthru
      _
    // Predicated region
    $region26: #{tpu_custom_call.1} parent=1 // pred_check
      _
    $region27: #{tpu_custom_call.1} parent=1 // pred_check_branch
      %54 = sbr.rel (0) target = $region29
    $region28: #{tpu_custom_call.1} parent=1 // pred_region
      %55 = dma.done [#allocation7], 6144
    $region29: #{tpu_custom_call.1} parent=1 // pred_fallthru
      _
    // Predicated region
    $region30: #{tpu_custom_call.1} parent=1 // pred_check
      _
    $region31: #{tpu_custom_call.1} parent=1 // pred_check_branch
      %57 = sbr.rel (0) target = $region33
    $region32: #{tpu_custom_call.1} parent=1 // pred_region
      %58 = dma.done [#allocation5], 16
    $region33: #{tpu_custom_call.1} parent=1 // pred_fallthru
      _
    %59 = sfence
    %v60 = vld [vmem:[#allocation2] sm:$0xff]
    %v61 = vld [vmem:[#allocation6] sm:$0xff]
    %v62 = vld [vmem:[#allocation6 + $0x8] sm:$0xff]
    %v63 = vld [vmem:[#allocation6 + $0x10] sm:$0xff]
    %v64 = vld [vmem:[#allocation6 + $0x18] sm:$0xff]
    %v65 = vld [vmem:[#allocation6 + $0x20] sm:$0xff]
    %v66 = vld [vmem:[#allocation6 + $0x28] sm:$0xff]
    %v67 = vld [vmem:[#allocation6 + $0x30] sm:$0xff]
    %v68 = vld [vmem:[#allocation6 + $0x38] sm:$0xff]
    %v69 = vld [vmem:[#allocation6 + $0x40] sm:$0xff]
    %v70 = vld [vmem:[#allocation6 + $0x48] sm:$0xff]
    %v71 = vld [vmem:[#allocation6 + $0x50] sm:$0xff]
    %v72 = vld [vmem:[#allocation6 + $0x58] sm:$0xff]
    %v73 = vld [vmem:[#allocation6 + $0x60] sm:$0xff]
    %v74 = vld [vmem:[#allocation6 + $0x68] sm:$0xff]
    %v75 = vld [vmem:[#allocation6 + $0x70] sm:$0xff]
    %v76 = vld [vmem:[#allocation6 + $0x78] sm:$0xff]
    %77 = vmatprep.subr.mxu0 0.0
    %78 = vmatpush1.msra.mxu0 %v61
    %79 = vmatprep.subr.mxu0 0.0
    %80 = vmatpush1.msra.mxu0 %v62
    %81 = vmatprep.subr.mxu0 0.0
    %82 = vmatpush1.msra.mxu0 %v63
    %83 = vmatprep.subr.mxu0 0.0
    %84 = vmatpush1.msra.mxu0 %v64
    %85 = vmatprep.subr.mxu0 0.0
    %86 = vmatpush1.msra.mxu0 %v65
    %87 = vmatprep.subr.mxu0 0.0
    %88 = vmatpush1.msra.mxu0 %v66
    %89 = vmatprep.subr.mxu0 0.0
    %90 = vmatpush1.msra.mxu0 %v67
    %91 = vmatprep.subr.mxu0 0.0
    %92 = vmatpush1.msra.mxu0 %v68
    %93 = vmatprep.subr.mxu0 0.0
    %94 = vmatpush1.msra.mxu0 %v69
    %95 = vmatprep.subr.mxu0 0.0
    %96 = vmatpush1.msra.mxu0 %v70
    %97 = vmatprep.subr.mxu0 0.0
    %98 = vmatpush1.msra.mxu0 %v71
    %99 = vmatprep.subr.mxu0 0.0
    %100 = vmatpush1.msra.mxu0 %v72
    %101 = vmatprep.subr.mxu0 0.0
    %102 = vmatpush1.msra.mxu0 %v73
    %103 = vmatprep.subr.mxu0 0.0
    %104 = vmatpush1.msra.mxu0 %v74
    %105 = vmatprep.subr.mxu0 0.0
    %106 = vmatpush1.msra.mxu0 %v75
    %107 = vmatprep.subr.mxu0 0.0
    %108 = vmatpush1.msra.mxu0 %v76
    %109 = vmatprep.subr.mxu0 0.0
    %110 = vmatpush1.msra.mxu0 0.0
    %111 = vmatprep.subr.mxu0 0.0
    %112 = vmatpush1.msra.mxu0 0.0
    %113 = vmatprep.subr.mxu0 0.0
    %114 = vmatpush1.msra.mxu0 0.0
    %115 = vmatprep.subr.mxu0 0.0
    %116 = vmatpush1.msra.mxu0 0.0
    %117 = vmatprep.subr.mxu0 0.0
    %118 = vmatpush1.msra.mxu0 0.0
    %119 = vmatprep.subr.mxu0 0.0
    %120 = vmatpush1.msra.mxu0 0.0
    %121 = vmatprep.subr.mxu0 0.0
    %122 = vmatpush1.msra.mxu0 0.0
    %123 = vmatprep.subr.mxu0 0.0
    %124 = vmatpush1.msra.mxu0 0.0
    %125 = vmatprep.subr.mxu0 0.0
    %126 = vmatpush1.msra.mxu0 0.0
    %127 = vmatprep.subr.mxu0 0.0
    %128 = vmatpush1.msra.mxu0 0.0
    %129 = vmatprep.subr.mxu0 0.0
    %130 = vmatpush1.msra.mxu0 0.0
    %131 = vmatprep.subr.mxu0 0.0
    %132 = vmatpush1.msra.mxu0 0.0
    %133 = vmatprep.subr.mxu0 0.0
    %134 = vmatpush1.msra.mxu0 0.0
    %135 = vmatprep.subr.mxu0 0.0
    %136 = vmatpush1.msra.mxu0 0.0
    %137 = vmatprep.subr.mxu0 0.0
    %138 = vmatpush1.msra.mxu0 0.0
    %139 = vmatprep.subr.mxu0 0.0
    %140 = vmatpush1.msra.mxu0 0.0
    %141 = vmatprep.mubr.f32.mxu0 0.0
    %142 = vmatmul.mubr.f32.gmra.mrb[0].mxu0 %v60
    %v143 = vpop.f32.mrb[0].mxu0
    %v144 = vadd.f32 0.0, %v143
    %v145 = vpop.f32.mrb[0].mxu0
    %146 = vdwg.mxu0
    %v147 = vrot.slane %v144, 4
    %v148 = vadd.f32 %v144, %v147
    %v149 = vrot.slane %v148, 2
    %v150 = vadd.f32 %v148, %v149
    %v151 = vrot.slane %v150, 1
    %v152 = vadd.f32 %v150, %v151
    %v153 = vrcp.pop 8.0
    %v154 = vmul.f32 %v152, %v153
    %v155 = vmul.f32 %v144, %v144
    %v156 = vrot.slane %v155, 4
    %v157 = vadd.f32 %v155, %v156
    %v158 = vrot.slane %v157, 2
    %v159 = vadd.f32 %v157, %v158
    %v160 = vrot.slane %v159, 1
    %v161 = vadd.f32 %v159, %v160
    %v162 = vmul.f32 %v161, %v153
    %v163 = vmul.f32 %v154, %v154
    %v164 = vsub.f32 %v162, %v163
    %v165 = vmax.f32 %v164, 0.0
    %v166 = vld [vmem:[%s2] sm:$0x1]
    %v167 = vadd.f32 %v165, 1e-05
    %v168 = vrsqrt.pop %v167
    %v169 = vmul.f32 %v166, %v168
    %v170 = vld [vmem:[%s3] sm:$0x1]
    %v171 = vmul.f32 %v154, %v169
    %v172 = vsub.f32 %v170, %v171
    %v173 = vlaneseq
    %v174 = vshrl.u32 %v173, 7
    %v175 = vsub.s32 0, %v174
    %v176 = vrot.slane %v169, %v175
    %v177 = vmul.f32 %v144, %v176
    %v178 = vlaneseq
    %v179 = vshrl.u32 %v178, 7
    %v180 = vsub.s32 0, %v179
    %v181 = vrot.slane %v172, %v180
    %v182 = vadd.f32 %v177, %v181
    %s183 = sld [smem:[#allocation8]]
    %vm184 = vcmp.gt.f32.partialorder %v182, 0.0
    %v185 = vstv %s183
    %v186 = vmul.f32 %v185, %v182
    %v187 = vsel %vm184, %v182, %v186
    %s188 = scalar_lea.vmem [#allocation6], 128
    %v189 = vld [vmem:[%s188] sm:$0xff]
    %v190 = vld [vmem:[%s188 + $0x8] sm:$0xff]
    %v191 = vld [vmem:[%s188 + $0x10] sm:$0xff]
    %v192 = vld [vmem:[%s188 + $0x18] sm:$0xff]
    %v193 = vld [vmem:[%s188 + $0x20] sm:$0xff]
    %v194 = vld [vmem:[%s188 + $0x28] sm:$0xff]
    %v195 = vld [vmem:[%s188 + $0x30] sm:$0xff]
    %v196 = vld [vmem:[%s188 + $0x38] sm:$0xff]
    %v197 = vld [vmem:[%s188 + $0x40] sm:$0xff]
    %v198 = vld [vmem:[%s188 + $0x48] sm:$0xff]
    %v199 = vld [vmem:[%s188 + $0x50] sm:$0xff]
    %v200 = vld [vmem:[%s188 + $0x58] sm:$0xff]
    %v201 = vld [vmem:[%s188 + $0x60] sm:$0xff]
    %v202 = vld [vmem:[%s188 + $0x68] sm:$0xff]
    %v203 = vld [vmem:[%s188 + $0x70] sm:$0xff]
    %v204 = vld [vmem:[%s188 + $0x78] sm:$0xff]
    %205 = vmatprep.subr.mxu0 0.0
    %206 = vmatpush1.msra.mxu0 %v189
    %207 = vmatprep.subr.mxu0 0.0
    %208 = vmatpush1.msra.mxu0 %v190
    %209 = vmatprep.subr.mxu0 0.0
    %210 = vmatpush1.msra.mxu0 %v191
    %211 = vmatprep.subr.mxu0 0.0
    %212 = vmatpush1.msra.mxu0 %v192
    %213 = vmatprep.subr.mxu0 0.0
    %214 = vmatpush1.msra.mxu0 %v193
    %215 = vmatprep.subr.mxu0 0.0
    %216 = vmatpush1.msra.mxu0 %v194
    %217 = vmatprep.subr.mxu0 0.0
    %218 = vmatpush1.msra.mxu0 %v195
    %219 = vmatprep.subr.mxu0 0.0
    %220 = vmatpush1.msra.mxu0 %v196
    %221 = vmatprep.subr.mxu0 0.0
    %222 = vmatpush1.msra.mxu0 %v197
    %223 = vmatprep.subr.mxu0 0.0
    %224 = vmatpush1.msra.mxu0 %v198
    %225 = vmatprep.subr.mxu0 0.0
    %226 = vmatpush1.msra.mxu0 %v199
    %227 = vmatprep.subr.mxu0 0.0
    %228 = vmatpush1.msra.mxu0 %v200
    %229 = vmatprep.subr.mxu0 0.0
    %230 = vmatpush1.msra.mxu0 %v201
    %231 = vmatprep.subr.mxu0 0.0
    %232 = vmatpush1.msra.mxu0 %v202
    %233 = vmatprep.subr.mxu0 0.0
    %234 = vmatpush1.msra.mxu0 %v203
    %235 = vmatprep.subr.mxu0 0.0
    %236 = vmatpush1.msra.mxu0 %v204
    %237 = vmatprep.subr.mxu0 0.0
    %238 = vmatpush1.msra.mxu0 0.0
    %239 = vmatprep.subr.mxu0 0.0
    %240 = vmatpush1.msra.mxu0 0.0
    %241 = vmatprep.subr.mxu0 0.0
    %242 = vmatpush1.msra.mxu0 0.0
    %243 = vmatprep.subr.mxu0 0.0
    %244 = vmatpush1.msra.mxu0 0.0
    %245 = vmatprep.subr.mxu0 0.0
    %246 = vmatpush1.msra.mxu0 0.0
    %247 = vmatprep.subr.mxu0 0.0
    %248 = vmatpush1.msra.mxu0 0.0
    %249 = vmatprep.subr.mxu0 0.0
    %250 = vmatpush1.msra.mxu0 0.0
    %251 = vmatprep.subr.mxu0 0.0
    %252 = vmatpush1.msra.mxu0 0.0
    %253 = vmatprep.subr.mxu0 0.0
    %254 = vmatpush1.msra.mxu0 0.0
    %255 = vmatprep.subr.mxu0 0.0
    %256 = vmatpush1.msra.mxu0 0.0
    %257 = vmatprep.subr.mxu0 0.0
    %258 = vmatpush1.msra.mxu0 0.0
    %259 = vmatprep.subr.mxu0 0.0
    %260 = vmatpush1.msra.mxu0 0.0
    %261 = vmatprep.subr.mxu0 0.0
    %262 = vmatpush1.msra.mxu0 0.0
    %263 = vmatprep.subr.mxu0 0.0
    %264 = vmatpush1.msra.mxu0 0.0
    %265 = vmatprep.subr.mxu0 0.0
    %266 = vmatpush1.msra.mxu0 0.0
    %267 = vmatprep.subr.mxu0 0.0
    %268 = vmatpush1.msra.mxu0 0.0
    %269 = vmatprep.mubr.f32.mxu0 0.0
    %270 = vmatmul.mubr.f32.gmra.mrb[0].mxu0 %v187
    %v271 = vpop.f32.mrb[0].mxu0
    %v272 = vadd.f32 0.0, %v271
    %v273 = vpop.f32.mrb[0].mxu0
    %274 = vdwg.mxu0
    %v275 = vrot.slane %v272, 4
    %v276 = vadd.f32 %v272, %v275
    %v277 = vrot.slane %v276, 2
    %v278 = vadd.f32 %v276, %v277
    %v279 = vrot.slane %v278, 1
    %v280 = vadd.f32 %v278, %v279
    %v281 = vmul.f32 %v280, %v153
    %v282 = vmul.f32 %v272, %v272
    %v283 = vrot.slane %v282, 4
    %v284 = vadd.f32 %v282, %v283
    %v285 = vrot.slane %v284, 2
    %v286 = vadd.f32 %v284, %v285
    %v287 = vrot.slane %v286, 1
    %v288 = vadd.f32 %v286, %v287
    %v289 = vmul.f32 %v288, %v153
    %v290 = vmul.f32 %v281, %v281
    %v291 = vsub.f32 %v289, %v290
    %v292 = vmax.f32 %v291, 0.0
    %v293 = vld [vmem:[%s2 + $0x1] sm:$0x1]
    %v294 = vadd.f32 %v292, 1e-05
    %v295 = vrsqrt.pop %v294
    %v296 = vmul.f32 %v293, %v295
    %v297 = vld [vmem:[%s3 + $0x1] sm:$0x1]
    %v298 = vmul.f32 %v281, %v296
    %v299 = vsub.f32 %v297, %v298
    %v300 = vlaneseq
    %v301 = vshrl.u32 %v300, 7
    %v302 = vsub.s32 0, %v301
    %v303 = vrot.slane %v296, %v302
    %v304 = vmul.f32 %v272, %v303
    %v305 = vlaneseq
    %v306 = vshrl.u32 %v305, 7
    %v307 = vsub.s32 0, %v306
    %v308 = vrot.slane %v299, %v307
    %v309 = vadd.f32 %v304, %v308
    %s310 = sld [smem:[#allocation8 + $0x1]]
    %vm311 = vcmp.gt.f32.partialorder %v309, 0.0
    %v312 = vstv %s310
    %v313 = vmul.f32 %v312, %v309
    %v314 = vsel %vm311, %v309, %v313
    %s315 = scalar_lea.vmem [#allocation6], 256
    %v316 = vld [vmem:[%s315] sm:$0xff]
    %v317 = vld [vmem:[%s315 + $0x8] sm:$0xff]
    %v318 = vld [vmem:[%s315 + $0x10] sm:$0xff]
    %v319 = vld [vmem:[%s315 + $0x18] sm:$0xff]
    %v320 = vld [vmem:[%s315 + $0x20] sm:$0xff]
    %v321 = vld [vmem:[%s315 + $0x28] sm:$0xff]
    %v322 = vld [vmem:[%s315 + $0x30] sm:$0xff]
    %v323 = vld [vmem:[%s315 + $0x38] sm:$0xff]
    %v324 = vld [vmem:[%s315 + $0x40] sm:$0xff]
    %v325 = vld [vmem:[%s315 + $0x48] sm:$0xff]
    %v326 = vld [vmem:[%s315 + $0x50] sm:$0xff]
    %v327 = vld [vmem:[%s315 + $0x58] sm:$0xff]
    %v328 = vld [vmem:[%s315 + $0x60] sm:$0xff]
    %v329 = vld [vmem:[%s315 + $0x68] sm:$0xff]
    %v330 = vld [vmem:[%s315 + $0x70] sm:$0xff]
    %v331 = vld [vmem:[%s315 + $0x78] sm:$0xff]
    %332 = vmatprep.subr.mxu0 0.0
    %333 = vmatpush1.msra.mxu0 %v316
    %334 = vmatprep.subr.mxu0 0.0
    %335 = vmatpush1.msra.mxu0 %v317
    %336 = vmatprep.subr.mxu0 0.0
    %337 = vmatpush1.msra.mxu0 %v318
    %338 = vmatprep.subr.mxu0 0.0
    %339 = vmatpush1.msra.mxu0 %v319
    %340 = vmatprep.subr.mxu0 0.0
    %341 = vmatpush1.msra.mxu0 %v320
    %342 = vmatprep.subr.mxu0 0.0
    %343 = vmatpush1.msra.mxu0 %v321
    %344 = vmatprep.subr.mxu0 0.0
    %345 = vmatpush1.msra.mxu0 %v322
    %346 = vmatprep.subr.mxu0 0.0
    %347 = vmatpush1.msra.mxu0 %v323
    %348 = vmatprep.subr.mxu0 0.0
    %349 = vmatpush1.msra.mxu0 %v324
    %350 = vmatprep.subr.mxu0 0.0
    %351 = vmatpush1.msra.mxu0 %v325
    %352 = vmatprep.subr.mxu0 0.0
    %353 = vmatpush1.msra.mxu0 %v326
    %354 = vmatprep.subr.mxu0 0.0
    %355 = vmatpush1.msra.mxu0 %v327
    %356 = vmatprep.subr.mxu0 0.0
    %357 = vmatpush1.msra.mxu0 %v328
    %358 = vmatprep.subr.mxu0 0.0
    %359 = vmatpush1.msra.mxu0 %v329
    %360 = vmatprep.subr.mxu0 0.0
    %361 = vmatpush1.msra.mxu0 %v330
    %362 = vmatprep.subr.mxu0 0.0
    %363 = vmatpush1.msra.mxu0 %v331
    %364 = vmatprep.subr.mxu0 0.0
    %365 = vmatpush1.msra.mxu0 0.0
    %366 = vmatprep.subr.mxu0 0.0
    %367 = vmatpush1.msra.mxu0 0.0
    %368 = vmatprep.subr.mxu0 0.0
    %369 = vmatpush1.msra.mxu0 0.0
    %370 = vmatprep.subr.mxu0 0.0
    %371 = vmatpush1.msra.mxu0 0.0
    %372 = vmatprep.subr.mxu0 0.0
    %373 = vmatpush1.msra.mxu0 0.0
    %374 = vmatprep.subr.mxu0 0.0
    %375 = vmatpush1.msra.mxu0 0.0
    %376 = vmatprep.subr.mxu0 0.0
    %377 = vmatpush1.msra.mxu0 0.0
    %378 = vmatprep.subr.mxu0 0.0
    %379 = vmatpush1.msra.mxu0 0.0
    %380 = vmatprep.subr.mxu0 0.0
    %381 = vmatpush1.msra.mxu0 0.0
    %382 = vmatprep.subr.mxu0 0.0
    %383 = vmatpush1.msra.mxu0 0.0
    %384 = vmatprep.subr.mxu0 0.0
    %385 = vmatpush1.msra.mxu0 0.0
    %386 = vmatprep.subr.mxu0 0.0
    %387 = vmatpush1.msra.mxu0 0.0
    %388 = vmatprep.subr.mxu0 0.0
    %389 = vmatpush1.msra.mxu0 0.0
    %390 = vmatprep.subr.mxu0 0.0
    %391 = vmatpush1.msra.mxu0 0.0
    %392 = vmatprep.subr.mxu0 0.0
    %393 = vmatpush1.msra.mxu0 0.0
    %394 = vmatprep.subr.mxu0 0.0
    %395 = vmatpush1.msra.mxu0 0.0
    %396 = vmatprep.mubr.f32.mxu0 0.0
    %397 = vmatmul.mubr.f32.gmra.mrb[0].mxu0 %v314
    %v398 = vpop.f32.mrb[0].mxu0
    %v399 = vadd.f32 0.0, %v398
    %v400 = vpop.f32.mrb[0].mxu0
    %401 = vdwg.mxu0
    %v402 = vrot.slane %v399, 4
    %v403 = vadd.f32 %v399, %v402
    %v404 = vrot.slane %v403, 2
    %v405 = vadd.f32 %v403, %v404
    %v406 = vrot.slane %v405, 1
    %v407 = vadd.f32 %v405, %v406
    %v408 = vmul.f32 %v407, %v153
    %v409 = vmul.f32 %v399, %v399
    %v410 = vrot.slane %v409, 4
    %v411 = vadd.f32 %v409, %v410
    %v412 = vrot.slane %v411, 2
    %v413 = vadd.f32 %v411, %v412
    %v414 = vrot.slane %v413, 1
    %v415 = vadd.f32 %v413, %v414
    %v416 = vmul.f32 %v415, %v153
    %v417 = vmul.f32 %v408, %v408
    %v418 = vsub.f32 %v416, %v417
    %v419 = vmax.f32 %v418, 0.0
    %v420 = vld [vmem:[%s2 + $0x2] sm:$0x1]
    %v421 = vadd.f32 %v419, 1e-05
    %v422 = vrsqrt.pop %v421
    %v423 = vmul.f32 %v420, %v422
    %v424 = vld [vmem:[%s3 + $0x2] sm:$0x1]
    %v425 = vmul.f32 %v408, %v423
    %v426 = vsub.f32 %v424, %v425
    %v427 = vlaneseq
    %v428 = vshrl.u32 %v427, 7
    %v429 = vsub.s32 0, %v428
    %v430 = vrot.slane %v423, %v429
    %v431 = vmul.f32 %v399, %v430
    %v432 = vlaneseq
    %v433 = vshrl.u32 %v432, 7
    %v434 = vsub.s32 0, %v433
    %v435 = vrot.slane %v426, %v434
    %v436 = vadd.f32 %v431, %v435
    %s437 = sld [smem:[#allocation8 + $0x2]]
    %vm438 = vcmp.gt.f32.partialorder %v436, 0.0
    %v439 = vstv %s437
    %v440 = vmul.f32 %v439, %v436
    %v441 = vsel %vm438, %v436, %v440
    %442 = vst [vmem:[#allocation9] sm:$0xff] %v441
    // Predicated region
    $region34: #{tpu_custom_call.1} parent=1 // pred_check
      _
    $region35: #{tpu_custom_call.1} parent=1 // pred_check_branch
      %444 = sbr.rel (0) target = $region37
    $region36: #{tpu_custom_call.1} parent=1 // pred_region
      %s446 = ssub.s32 128, 128
      %447 = vsyncadd [#allocation4], %s446
      %s449 = sshll.u32 [#allocation9], 4
      %s450 = int_to_ptr.vmem [resolvable:$true] %s449
      %452 = dma.vmem_to_hbm [thread:$0]  %s450, 128, %s5, [#allocation4]
    $region37: #{tpu_custom_call.1} parent=1 // pred_fallthru
      _
    // Predicated region
    $region38: #{tpu_custom_call.1} parent=1 // pred_check
      _
    $region39: #{tpu_custom_call.1} parent=1 // pred_check_branch
      %454 = sbr.rel (0) target = $region41
    $region40: #{tpu_custom_call.1} parent=1 // pred_region
      %455 = dma.done [#allocation4], 128
    $region41: #{tpu_custom_call.1} parent=1 // pred_fallthru
      _
    %456 = vsyncpa [#allocation3], 1
    %457 = vsyncpa [#allocation7], 1
    %458 = vsyncpa [#allocation4], 1
    %459 = vsyncpa [#allocation5], 1

</llo_original>
